<compile_context>
chip_gen: v7x
topology: tpu7x:2x2x1
jax: 0.10.0
libtpu: 0.0.40
codegen_flags: <defaults>
</compile_context>

<pallas_src>
import math

import jax
import jax.numpy as jnp
from jax.experimental import pallas as pl
from jax.experimental.pallas import tpu as pltpu


def _add_eta_kernel(x_ref, eta_ref, o_ref):
    # Elementwise VPU add; eta (1, P) broadcasts over the batch (sublane) axis.
    o_ref[...] = x_ref[...] + eta_ref[...]


def _lane_dense_views(x: jax.Array, eta: jax.Array):
    """Return (xk, etak, mode) where xk has a last dim that is a multiple of 128.

    mode: ("identity", None) | ("fold", fold) | ("pad", p)
    """
    b, p = x.shape
    if p % 128 == 0:
        return x, eta, ("identity", None)

    fold = math.lcm(p, 128) // p
    if b % fold == 0:
        # Fold `fold` rows into one lane-dense row; tile eta to match.
        xk = x.reshape(b // fold, fold * p)
        etak = jnp.tile(eta, fold)
        return xk, etak, ("fold", fold)

    # Fallback: pad the feature dim with zeros up to the next multiple of 128.
    pad = (-p) % 128
    xk = jnp.pad(x, ((0, 0), (0, pad)))
    etak = jnp.pad(eta, (0, pad))
    return xk, etak, ("pad", p)


def generator_forward(x: jax.Array, eta: jax.Array) -> jax.Array:
    """Computes x + eta (broadcast over the batch dim) via a Pallas TPU kernel.

    x:   [batch, p]
    eta: [p]
    """
    assert x.ndim == 2 and eta.ndim == 1 and x.shape[-1] == eta.shape[0]
    b, p = x.shape

    xk, etak, (mode, info) = _lane_dense_views(x, eta)
    bk, pk = xk.shape
    etak2d = etak.reshape(1, pk)

    # Tile the batch axis.  Budget ~4 MiB per x tile so that the
    # double-buffered working set (2x in + 2x out) stays around 16 MiB --
    # well under the scoped-VMEM default on every generation (incl. v7x).
    bytes_per_row = pk * xk.dtype.itemsize
    target_rows = max(8, (4 * 1024 * 1024) // bytes_per_row)
    target_rows = (target_rows // 8) * 8  # keep sublane-aligned
    if bk <= target_rows:
        tile_b = bk  # single block == full array dims (always layout-legal)
    else:
        tile_b = target_rows  # multiple of 8; pk is a multiple of 128

    grid = (pl.cdiv(bk, tile_b),)

    out_k = pl.pallas_call(
        _add_eta_kernel,
        out_shape=jax.ShapeDtypeStruct((bk, pk), xk.dtype),
        grid_spec=pl.GridSpec(
            grid=grid,
            in_specs=[
                # Streamed, batch-tiled x.
                pl.BlockSpec((tile_b, pk), lambda i: (i, 0)),
                # VMEM-resident eta: constant block index across the grid.
                pl.BlockSpec((1, pk), lambda i: (0, 0)),
            ],
            out_specs=pl.BlockSpec((tile_b, pk), lambda i: (i, 0)),
        ),
        compiler_params=pltpu.CompilerParams(
            dimension_semantics=("parallel",),
        ),
    )(xk, etak2d)

    # Undo the lane-dense layout plumbing.
    if mode == "fold":
        return out_k.reshape(b, p)
    if mode == "pad":
        return out_k[:, :info]
    return out_k


if __name__ == "__main__":
    key = jax.random.PRNGKey(0)
    k_eta, k_x = jax.random.split(key)

    p = 32          # feature dimension of the Generator
    batch = 8       # leading (broadcast) dimension of x

    # Deterministic parameter init mirroring `torch.randn(p) / p`.
    eta = jax.random.normal(k_eta, (p,), dtype=jnp.float32) / p
    x = jax.random.normal(k_x, (batch, p), dtype=jnp.float32)

    out = generator_forward(x, eta)
    out = jax.block_until_ready(out)

    # Correctness check against plain-JAX reference.
    ref = x + eta[None, :]
    assert out.shape == (batch, p)
    assert jnp.allclose(out, ref, atol=1e-6), "mismatch vs reference"

    print("KERNEL_OK")
</pallas_src>

<mosaic_0001>
module attributes {stable_mosaic.version = 11 : i64} {
  func.func @_add_eta_kernel(%arg0: i32, %arg1: memref<2x128xf32, #tpu.memory_space<vmem>>, %arg2: memref<1x128xf32, #tpu.memory_space<vmem>>, %arg3: memref<2x128xf32, #tpu.memory_space<vmem>>) attributes {dimension_semantics = [#tpu.dimension_semantics<parallel>], iteration_bounds = array<i64: 1>, scalar_prefetch = 0 : i64, scratch_operands = 0 : i64, tpu.core_type = #tpu.core_type<tc>, window_params = [{transform_indices = @transform_0, window_bounds = array<i64: 2, 128>}, {pipeline_mode = #tpu.pipeline_mode<synchronous>, transform_indices = @transform_1, window_bounds = array<i64: 1, 128>}, {transform_indices = @transform_2, window_bounds = array<i64: 2, 128>}]} {
    %c0 = arith.constant 0 : index
    %c0_0 = arith.constant 0 : index
    %0 = vector.load %arg1[%c0, %c0_0] : memref<2x128xf32, #tpu.memory_space<vmem>>, vector<2x128xf32>
    %c0_1 = arith.constant 0 : index
    %c0_2 = arith.constant 0 : index
    %1 = vector.load %arg2[%c0_1, %c0_2] : memref<1x128xf32, #tpu.memory_space<vmem>>, vector<1x128xf32>
    %2 = vector.broadcast %1 : vector<1x128xf32> to vector<2x128xf32>
    %3 = arith.addf %0, %2 : vector<2x128xf32>
    %c0_3 = arith.constant 0 : index
    %c0_4 = arith.constant 0 : index
    %4 = vector.load %arg3[%c0_3, %c0_4] : memref<2x128xf32, #tpu.memory_space<vmem>>, vector<2x128xf32>
    tpu.vector_store %arg3[%c0_3, %c0_4], %3 {strides = array<i32>} : memref<2x128xf32, #tpu.memory_space<vmem>>, vector<2x128xf32>,
    return
  }
  func.func @transform_0(%arg0: i32) -> (i32, i32) {
    %c0_i32 = arith.constant 0 : i32
    %c0_i32_0 = arith.constant 0 : i32
    return %arg0, %c0_i32 : i32, i32
  }
  func.func @transform_1(%arg0: i32) -> (i32, i32) {
    %c0_i32 = arith.constant 0 : i32
    %c0_i32_0 = arith.constant 0 : i32
    %c0_i32_1 = arith.constant 0 : i32
    return %c0_i32, %c0_i32_0 : i32, i32
  }
  func.func @transform_2(%arg0: i32) -> (i32, i32) {
    %c0_i32 = arith.constant 0 : i32
    %c0_i32_0 = arith.constant 0 : i32
    return %arg0, %c0_i32 : i32, i32
  }
}

</mosaic_0001>

<llo_original>
// kernel: tpu_custom_call.1
$region0: #{tpu_custom_call.1}
  #allocation0 [shape = 'u32[]', space=smem, size = 0x4, offset = 0x4, fixed_abs, tag = 'smem constant byte address 0x4 - core index']
  #allocation1 [shape = 'u32[144,128]{1,0:T(1,128)}', space=vmem, size = 0x12000, scoped, tag = 'internal scratch']
  %s0 = inlined_call_operand.hbm [shape: f32[2,128], index: 0, kind: input, shape index: {}]
  %s1 = inlined_call_operand.vmem [shape: f32[1,128], index: 1, kind: input, shape index: {}]
  %s2 = inlined_call_operand.hbm [shape: f32[2,128], index: 2, kind: output, shape index: {}]
  %s3 = sld [smem:[#allocation0]]
  $region22: #{tpu_custom_call.1} parent=0
    _
  %s5 = ssub.s32 1, %s3
  %s6 = scalar_select 0, %s5, %s3
  $region1: #{tpu_custom_call.1} parent=0
    #allocation2 [shape = 'u8[1024]{0}', space=vmem, size = 0x400, scoped, tag = 'input window, operand 0, single buffered']
    #allocation3 [shape = 's32[1]{0}', space=sflag, size = 0x4, scoped, tag = 'scoped memory for tpu_custom_call.1']
    #allocation4 [shape = 's32[1]{0}', space=sflag, size = 0x4, scoped, tag = 'scoped memory for tpu_custom_call.1']
    #allocation5 [shape = 'u8[1024]{0}', space=vmem, size = 0x400, scoped, tag = 'output window, operand 0, single buffered']
    %7 = vsyncpa [#allocation3], 0
    %8 = vsyncpa [#allocation4], 0
    // Predicated region
    $region2: #{tpu_custom_call.1} parent=1 // pred_check
      _
    $region3: #{tpu_custom_call.1} parent=1 // pred_check_branch
      %10 = sbr.rel (0) target = $region5
    $region4: #{tpu_custom_call.1} parent=1 // pred_region
      %s12 = ssub.s32 32, 32
      %13 = vsyncadd [#allocation3], %s12
      %s15 = sshll.u32 [#allocation2], 4
      %s16 = int_to_ptr.vmem [resolvable:$true] %s15
      %18 = dma.hbm_to_vmem [thread:$0]  %s0, 32, %s16, [#allocation3]
    $region5: #{tpu_custom_call.1} parent=1 // pred_fallthru
      _
    // Predicated region
    $region6: #{tpu_custom_call.1} parent=1 // pred_check
      _
    $region7: #{tpu_custom_call.1} parent=1 // pred_check_branch
      %20 = sbr.rel (0) target = $region9
    $region8: #{tpu_custom_call.1} parent=1 // pred_region
      _
    $region9: #{tpu_custom_call.1} parent=1 // pred_fallthru
      _
    // Predicated region
    $region10: #{tpu_custom_call.1} parent=1 // pred_check
      _
    $region11: #{tpu_custom_call.1} parent=1 // pred_check_branch
      %22 = sbr.rel (0) target = $region13
    $region12: #{tpu_custom_call.1} parent=1 // pred_region
      %23 = dma.done [#allocation3], 32
    $region13: #{tpu_custom_call.1} parent=1 // pred_fallthru
      _
    %v24 = vld [vmem:[#allocation2] sm:$0x3]
    %v25 = vld [vmem:[%s1] sm:$0x1]
    %v27 = vlaneseq
    %v28 = vshrl.u32 %v27, 7
    %v29 = vsub.s32 0, %v28
    %v30 = vrot.slane %v25, %v29
    %v32 = vadd.f32 %v24, %v30
    %33 = vst [vmem:[#allocation5] sm:$0x3] %v32
    // Predicated region
    $region14: #{tpu_custom_call.1} parent=1 // pred_check
      _
    $region15: #{tpu_custom_call.1} parent=1 // pred_check_branch
      %35 = sbr.rel (0) target = $region17
    $region16: #{tpu_custom_call.1} parent=1 // pred_region
      %s37 = ssub.s32 32, 32
      %38 = vsyncadd [#allocation4], %s37
      %s40 = sshll.u32 [#allocation5], 4
      %s41 = int_to_ptr.vmem [resolvable:$true] %s40
      %43 = dma.vmem_to_hbm [thread:$0]  %s41, 32, %s2, [#allocation4]
    $region17: #{tpu_custom_call.1} parent=1 // pred_fallthru
      _
    // Predicated region
    $region18: #{tpu_custom_call.1} parent=1 // pred_check
      _
    $region19: #{tpu_custom_call.1} parent=1 // pred_check_branch
      %45 = sbr.rel (0) target = $region21
    $region20: #{tpu_custom_call.1} parent=1 // pred_region
      %46 = dma.done [#allocation4], 32
    $region21: #{tpu_custom_call.1} parent=1 // pred_fallthru
      _
    %47 = vsyncpa [#allocation3], 1
    %48 = vsyncpa [#allocation4], 1

</llo_original>
